<compile_context>
chip_gen: v7x
topology: tpu7x:2x2x1
jax: 0.10.0
libtpu: 0.0.40
codegen_flags: <defaults>
</compile_context>

<pallas_src>
import jax
import jax.numpy as jnp
from jax import lax
from jax.experimental import pallas as pl
from jax.experimental.pallas import tpu as pltpu

_LANE = 128
_SUBLANE = 8
_GRAIN = _SUBLANE * _LANE            # minimal pad granularity: 1024 elements
_SENTINEL_THRESH = -999.0
_PAD_VALUE = -1.0e9                  # < -999, so pad elements self-mask as "unlabeled"
_VMEM_INPUT_BUDGET = 12 * 1024 * 1024   # keep under v5e's 16 MiB scoped-VMEM default


def _make_kernel(tile_rows, steps_per_split, rows, need_row_mask):
    """Builds the per-block kernel with static tiling constants baked in."""

    def kernel(pred_ref, lab_ref, sumsq_ref, cnt_ref):
        s = pl.program_id(1)

        @pl.when(s == 0)
        def _init():
            sumsq_ref[...] = jnp.zeros_like(sumsq_ref)
            cnt_ref[...] = jnp.zeros_like(cnt_ref)

        pred = pred_ref[...].astype(jnp.float32)
        lab = lab_ref[...].astype(jnp.float32)
        valid = lab >= jnp.float32(_SENTINEL_THRESH)       # == ~(labels < -999)

        if need_row_mask:
            # Last tile overhangs the true row count and/or the 2-way split was padded
            # with clamped duplicate steps: mask rows at/after the real row count using
            # the UNCLAMPED global step index, so duplicates contribute exactly zero.
            gstep = pl.program_id(0) * steps_per_split + s
            row_ids = gstep * tile_rows + lax.broadcasted_iota(
                jnp.int32, (tile_rows, _LANE), 0)
            valid = jnp.logical_and(valid, row_ids < rows)

        diff = pred - lab
        sq = jnp.where(valid, diff * diff, jnp.float32(0.0))
        ones = jnp.where(valid, jnp.float32(1.0), jnp.float32(0.0))
        # Fold the tile onto a vreg-shaped (8, 128) accumulator with pure elementwise
        # adds (VPU); the one cross-lane/sublane reduce happens in the jnp epilogue.
        sumsq_ref[...] += jnp.sum(sq.reshape(-1, _SUBLANE, _LANE), axis=0, keepdims=True)
        cnt_ref[...] += jnp.sum(ones.reshape(-1, _SUBLANE, _LANE), axis=0, keepdims=True)

    return kernel


def _ladder_mse_jnp(pred_flat, lab_flat):
    pred = pred_flat.astype(jnp.float32)
    lab = lab_flat.astype(jnp.float32)
    valid = lab >= jnp.float32(_SENTINEL_THRESH)
    cnt = jnp.sum(valid.astype(jnp.float32))
    sum_sq = jnp.sum(jnp.where(valid, (pred - lab) ** 2, 0.0))
    return jnp.where(cnt > 0.0, sum_sq / jnp.maximum(cnt, 1.0), jnp.float32(0.0))


def _ladder_mse_pallas(pred_flat, lab_flat, max_tile_rows):
    n = pred_flat.shape[0]
    n_pad = -(-n // _GRAIN) * _GRAIN
    if n_pad != n:
        # Sub-1024-element tail pad only; large well-shaped inputs take a zero-copy path.
        pred_flat = jnp.pad(pred_flat, (0, n_pad - n))
        lab_flat = jnp.pad(lab_flat, (0, n_pad - n),
                           constant_values=jnp.asarray(_PAD_VALUE, lab_flat.dtype))
    rows = n_pad // _LANE                                    # always a multiple of 8

    # Tile as large as possible (default 2048 rows = 1 MiB f32 per input block) while
    # keeping 2 inputs x 2 pipeline buffers under the smallest scoped-VMEM default.
    bytes_per_row = _LANE * (pred_flat.dtype.itemsize + lab_flat.dtype.itemsize)
    cap_rows = max(_SUBLANE,
                   (_VMEM_INPUT_BUDGET // (2 * bytes_per_row)) // _SUBLANE * _SUBLANE)
    tile_rows = min(max(_SUBLANE, (max_tile_rows // _SUBLANE) * _SUBLANE), cap_rows, rows)

    total_steps = pl.cdiv(rows, tile_rows)
    num_split = 2 if total_steps >= 2 else 1                 # shard over v7x's 2 TCs
    steps_per_split = pl.cdiv(total_steps, num_split)
    need_row_mask = (num_split * steps_per_split * tile_rows) != rows

    def in_index_map(c, s):
        # Clamp so the DMA window never starts past the array end; the clamped duplicate
        # steps are fully zeroed in-kernel via the (unclamped) row-index mask.
        return (jnp.minimum(c * steps_per_split + s, total_steps - 1), 0)

    pred2d = pred_flat.reshape(rows, _LANE)
    lab2d = lab_flat.reshape(rows, _LANE)

    kernel = _make_kernel(tile_rows, steps_per_split, rows, need_row_mask)

    part_sq, part_cnt = pl.pallas_call(
        kernel,
        out_shape=(jax.ShapeDtypeStruct((num_split, _SUBLANE, _LANE), jnp.float32),
                   jax.ShapeDtypeStruct((num_split, _SUBLANE, _LANE), jnp.float32)),
        grid_spec=pltpu.PrefetchScalarGridSpec(
            num_scalar_prefetch=0,
            grid=(num_split, steps_per_split),
            in_specs=[
                pl.BlockSpec((tile_rows, _LANE), in_index_map),
                pl.BlockSpec((tile_rows, _LANE), in_index_map),
            ],
            out_specs=(
                pl.BlockSpec((1, _SUBLANE, _LANE), lambda c, s: (c, 0, 0)),
                pl.BlockSpec((1, _SUBLANE, _LANE), lambda c, s: (c, 0, 0)),
            ),
        ),
        compiler_params=pltpu.CompilerParams(
            dimension_semantics=("parallel", "arbitrary"),
        ),
    )(pred2d, lab2d)

    sum_sq = jnp.sum(part_sq)
    cnt = jnp.sum(part_cnt)
    # torch guard: no valid labels at all -> mse term is exactly 0.0
    return jnp.where(cnt > 0.0, sum_sq / jnp.maximum(cnt, 1.0), jnp.float32(0.0))


def ladder_loss(pred, labels, unsup_loss, *, return_list=False,
                max_tile_rows=2048, min_pallas_elems=65536):
    """LadderLoss.forward(outputs=(pred, unsup_loss), labels).

    pred / labels: same number of elements; labels < -999 mark unlabeled samples.
    unsup_loss: scalar unsupervised (ladder) loss term, passed through.
    """
    # TODO(synk): for multi-column labels the torch code's where(...)[0] duplicates row
    # indices; here the mask is applied element-wise, which is identical for the intended
    # 1-D / [B, 1] label layout.
    pred_flat = jnp.ravel(jnp.asarray(pred))
    lab_flat = jnp.ravel(jnp.asarray(labels))
    assert pred_flat.shape == lab_flat.shape, "predictions and labels must have the same size"
    n = pred_flat.shape[0]

    if n == 0 or n < min_pallas_elems:
        # Dispatch / single-tile overhead dominates tiny inputs; a fused XLA reduce wins.
        mse = _ladder_mse_jnp(pred_flat, lab_flat)
    else:
        mse = _ladder_mse_pallas(pred_flat, lab_flat, max_tile_rows)

    if return_list:
        return [mse, jnp.asarray(unsup_loss)]
    return mse + jnp.asarray(unsup_loss, jnp.float32)   # torch's `mse_loss + unsup`


if __name__ == "__main__":
    key = jax.random.PRNGKey(0)

    def ref_mse(p, l):
        # Pure-JAX reference of the torch semantics (gather valid rows, mean-square).
        p = p.astype(jnp.float32)
        l = l.astype(jnp.float32)
        valid_idx = jnp.where(~(l < -999.0))[0]
        if valid_idx.shape[0] > 0:
            return jnp.mean((p[valid_idx] - l[valid_idx]) ** 2)
        return jnp.float32(0.0)

    # ---- case 1: small f32 batch (forces the Pallas kernel via min_pallas_elems=0) ----
    batch = 64
    k_pred, k_lab, k_mask = jax.random.split(key, 3)
    preds = jax.random.normal(k_pred, (batch,), dtype=jnp.float32)        # outputs[0]
    true_labels = jax.random.normal(k_lab, (batch,), dtype=jnp.float32)
    unlabeled = jax.random.bernoulli(k_mask, 0.4, (batch,))               # semi-supervised
    labels = jnp.where(unlabeled, jnp.float32(-1000.0), true_labels)      # -1000 == no label
    unsup = jnp.float32(0.37)                                             # outputs[1]

    total = jax.block_until_ready(ladder_loss(preds, labels, unsup, min_pallas_elems=0))
    mse_l, unsup_l = ladder_loss(preds, labels, unsup, return_list=True, min_pallas_elems=0)
    mse_l = jax.block_until_ready(mse_l)

    mse_ref = ref_mse(preds, labels)
    total_ref = mse_ref + unsup
    assert jnp.allclose(total, total_ref, rtol=1e-5, atol=1e-6), (total, total_ref)
    assert jnp.allclose(mse_l, mse_ref, rtol=1e-5, atol=1e-6), (mse_l, mse_ref)
    assert jnp.allclose(unsup_l, unsup, rtol=1e-6, atol=0.0)

    # Small-n jnp fast path (default threshold) must agree with the kernel.
    total_fast = jax.block_until_ready(ladder_loss(preds, labels, unsup))
    assert jnp.allclose(total_fast, total, rtol=1e-6, atol=1e-6), (total_fast, total)

    # ---- case 2: bf16 inputs, multi-step grid + 2-way split + overhang row mask ----
    n2 = 5000
    k1, k2, k3 = jax.random.split(jax.random.PRNGKey(1), 3)
    preds2 = jax.random.normal(k1, (n2,), dtype=jnp.float32).astype(jnp.bfloat16)
    labels2_f = jax.random.normal(k2, (n2,), dtype=jnp.float32)
    unl2 = jax.random.bernoulli(k3, 0.3, (n2,))
    labels2 = jnp.where(unl2, -1000.0, labels2_f).astype(jnp.bfloat16)

    total2 = jax.block_until_ready(
        ladder_loss(preds2, labels2, unsup, min_pallas_elems=0, max_tile_rows=16))
    total2_ref = ref_mse(preds2, labels2) + unsup
    assert jnp.allclose(total2, total2_ref, rtol=1e-4, atol=1e-5), (total2, total2_ref)

    # ---- case 3: no valid labels at all -> mse term must be exactly 0, total == unsup ----
    all_invalid = jnp.full((batch,), -1000.0, dtype=jnp.float32)
    total_empty = jax.block_until_ready(
        ladder_loss(preds, all_invalid, unsup, min_pallas_elems=0))
    assert jnp.allclose(total_empty, unsup, rtol=1e-6, atol=0.0), (total_empty, unsup)

    print("KERNEL_OK")
</pallas_src>

<mosaic_0001>
module attributes {stable_mosaic.version = 11 : i64} {
  func.func @kernel(%arg0: i32, %arg1: i32, %arg2: memref<8x128xf32, #tpu.memory_space<vmem>>, %arg3: memref<8x128xf32, #tpu.memory_space<vmem>>, %arg4: memref<1x8x128xf32, #tpu.memory_space<vmem>>, %arg5: memref<1x8x128xf32, #tpu.memory_space<vmem>>) attributes {dimension_semantics = [#tpu.dimension_semantics<parallel>, #tpu.dimension_semantics<arbitrary>], iteration_bounds = array<i64: 1, 1>, scalar_prefetch = 0 : i64, scratch_operands = 0 : i64, tpu.core_type = #tpu.core_type<tc>, window_params = [{transform_indices = @transform_0, window_bounds = array<i64: 8, 128>}, {transform_indices = @transform_1, window_bounds = array<i64: 8, 128>}, {transform_indices = @transform_2, window_bounds = array<i64: 1, 8, 128>}, {transform_indices = @transform_3, window_bounds = array<i64: 1, 8, 128>}]} {
    %c0_i32 = arith.constant 0 : i32
    %0 = arith.cmpi eq, %arg1, %c0_i32 : i32
    %1 = arith.extui %0 : i1 to i32
    %c0_i32_0 = arith.constant 0 : i32
    %2 = arith.cmpi ne, %1, %c0_i32_0 : i32
    scf.if %2 {
      %cst_21 = arith.constant 0.000000e+00 : f32
      %26 = vector.broadcast %cst_21 : f32 to vector<1x8x128xf32>
      %c0_22 = arith.constant 0 : index
      %c0_23 = arith.constant 0 : index
      %c0_24 = arith.constant 0 : index
      %27 = vector.load %arg4[%c0_22, %c0_23, %c0_24] : memref<1x8x128xf32, #tpu.memory_space<vmem>>, vector<1x8x128xf32>
      tpu.vector_store %arg4[%c0_22, %c0_23, %c0_24], %26 {strides = array<i32>} : memref<1x8x128xf32, #tpu.memory_space<vmem>>, vector<1x8x128xf32>,
      %cst_25 = arith.constant 0.000000e+00 : f32
      %28 = vector.broadcast %cst_25 : f32 to vector<1x8x128xf32>
      %c0_26 = arith.constant 0 : index
      %c0_27 = arith.constant 0 : index
      %c0_28 = arith.constant 0 : index
      %29 = vector.load %arg5[%c0_26, %c0_27, %c0_28] : memref<1x8x128xf32, #tpu.memory_space<vmem>>, vector<1x8x128xf32>
      tpu.vector_store %arg5[%c0_26, %c0_27, %c0_28], %28 {strides = array<i32>} : memref<1x8x128xf32, #tpu.memory_space<vmem>>, vector<1x8x128xf32>,
    } else {
    }
    %c0 = arith.constant 0 : index
    %c0_1 = arith.constant 0 : index
    %3 = vector.load %arg2[%c0, %c0_1] : memref<8x128xf32, #tpu.memory_space<vmem>>, vector<8x128xf32>
    %c0_2 = arith.constant 0 : index
    %c0_3 = arith.constant 0 : index
    %4 = vector.load %arg3[%c0_2, %c0_3] : memref<8x128xf32, #tpu.memory_space<vmem>>, vector<8x128xf32>
    %cst = arith.constant -9.990000e+02 : f32
    %5 = vector.broadcast %cst : f32 to vector<8x128xf32>
    %6 = arith.cmpf oge, %4, %5 : vector<8x128xf32>
    %7 = arith.subf %3, %4 : vector<8x128xf32>
    %8 = arith.mulf %7, %7 : vector<8x128xf32>
    %cst_4 = arith.constant 0.000000e+00 : f32
    %9 = vector.broadcast %cst_4 : f32 to vector<8x128xf32>
    %10 = arith.select %6, %8, %9 : vector<8x128xi1>, vector<8x128xf32>
    %cst_5 = arith.constant 1.000000e+00 : f32
    %cst_6 = arith.constant 0.000000e+00 : f32
    %11 = vector.broadcast %cst_5 : f32 to vector<8x128xf32>
    %12 = vector.broadcast %cst_6 : f32 to vector<8x128xf32>
    %13 = arith.select %6, %11, %12 : vector<8x128xi1>, vector<8x128xf32>
    %c0_7 = arith.constant 0 : index
    %c0_8 = arith.constant 0 : index
    %c0_9 = arith.constant 0 : index
    %14 = vector.load %arg4[%c0_7, %c0_8, %c0_9] : memref<1x8x128xf32, #tpu.memory_space<vmem>>, vector<1x8x128xf32>
    %15 = vector.shape_cast %10 : vector<8x128xf32> to vector<1x8x128xf32>
    %cst_10 = arith.constant dense<0.000000e+00> : vector<8x128xf32>
    %16 = vector.multi_reduction <add>, %15, %cst_10 [0] : vector<1x8x128xf32> to vector<8x128xf32>
    %17 = vector.shape_cast %16 : vector<8x128xf32> to vector<1x8x128xf32>
    %18 = arith.addf %14, %17 : vector<1x8x128xf32>
    %c0_11 = arith.constant 0 : index
    %c0_12 = arith.constant 0 : index
    %c0_13 = arith.constant 0 : index
    %19 = vector.load %arg4[%c0_11, %c0_12, %c0_13] : memref<1x8x128xf32, #tpu.memory_space<vmem>>, vector<1x8x128xf32>
    tpu.vector_store %arg4[%c0_11, %c0_12, %c0_13], %18 {strides = array<i32>} : memref<1x8x128xf32, #tpu.memory_space<vmem>>, vector<1x8x128xf32>,
    %c0_14 = arith.constant 0 : index
    %c0_15 = arith.constant 0 : index
    %c0_16 = arith.constant 0 : index
    %20 = vector.load %arg5[%c0_14, %c0_15, %c0_16] : memref<1x8x128xf32, #tpu.memory_space<vmem>>, vector<1x8x128xf32>
    %21 = vector.shape_cast %13 : vector<8x128xf32> to vector<1x8x128xf32>
    %cst_17 = arith.constant dense<0.000000e+00> : vector<8x128xf32>
    %22 = vector.multi_reduction <add>, %21, %cst_17 [0] : vector<1x8x128xf32> to vector<8x128xf32>
    %23 = vector.shape_cast %22 : vector<8x128xf32> to vector<1x8x128xf32>
    %24 = arith.addf %20, %23 : vector<1x8x128xf32>
    %c0_18 = arith.constant 0 : index
    %c0_19 = arith.constant 0 : index
    %c0_20 = arith.constant 0 : index
    %25 = vector.load %arg5[%c0_18, %c0_19, %c0_20] : memref<1x8x128xf32, #tpu.memory_space<vmem>>, vector<1x8x128xf32>
    tpu.vector_store %arg5[%c0_18, %c0_19, %c0_20], %24 {strides = array<i32>} : memref<1x8x128xf32, #tpu.memory_space<vmem>>, vector<1x8x128xf32>,
    return
  }
  func.func @transform_0(%arg0: i32, %arg1: i32) -> (i32, i32) {
    %c1_i32 = arith.constant 1 : i32
    %0 = arith.muli %arg0, %c1_i32 : i32
    %1 = arith.addi %0, %arg1 : i32
    %c0_i32 = arith.constant 0 : i32
    %2 = arith.minsi %1, %c0_i32 : i32
    %c0_i32_0 = arith.constant 0 : i32
    %c0_i32_1 = arith.constant 0 : i32
    return %2, %c0_i32_0 : i32, i32
  }
  func.func @transform_1(%arg0: i32, %arg1: i32) -> (i32, i32) {
    %c1_i32 = arith.constant 1 : i32
    %0 = arith.muli %arg0, %c1_i32 : i32
    %1 = arith.addi %0, %arg1 : i32
    %c0_i32 = arith.constant 0 : i32
    %2 = arith.minsi %1, %c0_i32 : i32
    %c0_i32_0 = arith.constant 0 : i32
    %c0_i32_1 = arith.constant 0 : i32
    return %2, %c0_i32_0 : i32, i32
  }
  func.func @transform_2(%arg0: i32, %arg1: i32) -> (i32, i32, i32) {
    %c0_i32 = arith.constant 0 : i32
    %c0_i32_0 = arith.constant 0 : i32
    %c0_i32_1 = arith.constant 0 : i32
    return %arg0, %c0_i32, %c0_i32_0 : i32, i32, i32
  }
  func.func @transform_3(%arg0: i32, %arg1: i32) -> (i32, i32, i32) {
    %c0_i32 = arith.constant 0 : i32
    %c0_i32_0 = arith.constant 0 : i32
    %c0_i32_1 = arith.constant 0 : i32
    return %arg0, %c0_i32, %c0_i32_0 : i32, i32, i32
  }
}

</mosaic_0001>

<llo_original>
// kernel: tpu_custom_call.1
$region0: #{tpu_custom_call.1}
  #allocation0 [shape = 'u32[]', space=smem, size = 0x4, offset = 0x4, fixed_abs, tag = 'smem constant byte address 0x4 - core index']
  #allocation1 [shape = 'u32[144,128]{1,0:T(1,128)}', space=vmem, size = 0x12000, scoped, tag = 'internal scratch']
  %s0 = inlined_call_operand.hbm [shape: f32[8,128], index: 0, kind: input, shape index: {}]
  %s1 = inlined_call_operand.hbm [shape: f32[8,128], index: 1, kind: input, shape index: {}]
  %s2 = inlined_call_operand.hbm [shape: f32[1,8,128], index: 2, kind: output, shape index: {0}]
  %s3 = inlined_call_operand.hbm [shape: f32[1,8,128], index: 3, kind: output, shape index: {1}]
  %4 = xla_tuple %s2, %s3
  %s5 = sld [smem:[#allocation0]]
  $region38: #{tpu_custom_call.1} parent=0
    _
  %s7 = ssub.s32 1, %s5
  %s8 = scalar_select 0, %s7, %s5
  $region1: #{tpu_custom_call.1} parent=0
    #allocation2 [shape = 'u8[4096]{0}', space=vmem, size = 0x1000, scoped, tag = 'input window, operand 0, single buffered']
    #allocation3 [shape = 's32[1]{0}', space=sflag, size = 0x4, scoped, tag = 'scoped memory for tpu_custom_call.1']
    #allocation4 [shape = 's32[1]{0}', space=sflag, size = 0x4, scoped, tag = 'scoped memory for tpu_custom_call.1']
    #allocation5 [shape = 'u8[4096]{0}', space=vmem, size = 0x1000, scoped, tag = 'input window, operand 1, single buffered']
    #allocation6 [shape = 's32[1]{0}', space=sflag, size = 0x4, scoped, tag = 'scoped memory for tpu_custom_call.1']
    #allocation7 [shape = 'u8[4096]{0}', space=vmem, size = 0x1000, scoped, tag = 'output window, operand 0, single buffered']
    #allocation8 [shape = 'u8[4096]{0}', space=vmem, size = 0x1000, scoped, tag = 'output window, operand 1, single buffered']
    #allocation9 [shape = 's32[1]{0}', space=sflag, size = 0x4, scoped, tag = 'scoped memory for tpu_custom_call.1']
    %9 = vsyncpa [#allocation3], 0
    %10 = vsyncpa [#allocation6], 0
    %11 = vsyncpa [#allocation4], 0
    %12 = vsyncpa [#allocation9], 0
    // Predicated region
    $region2: #{tpu_custom_call.1} parent=1 // pred_check
      _
    $region3: #{tpu_custom_call.1} parent=1 // pred_check_branch
      %14 = sbr.rel (0) target = $region5
    $region4: #{tpu_custom_call.1} parent=1 // pred_region
      %s15 = sadd.s32 0, 0
      %p16 = scmp.lt.s32.totalorder %s15, 0
      %s17 = scalar_select %p16, %s15, 0
      %s19 = ssub.s32 128, 128
      %20 = vsyncadd [#allocation3], %s19
      %s21 = smul.addr %s17, 128
      %s22 = scalar_lea.hbm %s0, %s21
      %s24 = sshll.u32 [#allocation2], 4
      %s25 = int_to_ptr.vmem [resolvable:$true] %s24
      %27 = dma.hbm_to_vmem [thread:$0]  %s22, 128, %s25, [#allocation3]
    $region5: #{tpu_custom_call.1} parent=1 // pred_fallthru
      _
    // Predicated region
    $region6: #{tpu_custom_call.1} parent=1 // pred_check
      _
    $region7: #{tpu_custom_call.1} parent=1 // pred_check_branch
      %29 = sbr.rel (0) target = $region9
    $region8: #{tpu_custom_call.1} parent=1 // pred_region
      %s30 = sadd.s32 0, 0
      %p31 = scmp.lt.s32.totalorder %s30, 0
      %s32 = scalar_select %p31, %s30, 0
      %s34 = ssub.s32 128, 128
      %35 = vsyncadd [#allocation6], %s34
      %s36 = smul.addr %s32, 128
      %s37 = scalar_lea.hbm %s1, %s36
      %s39 = sshll.u32 [#allocation5], 4
      %s40 = int_to_ptr.vmem [resolvable:$true] %s39
      %42 = dma.hbm_to_vmem [thread:$0]  %s37, 128, %s40, [#allocation6]
    $region9: #{tpu_custom_call.1} parent=1 // pred_fallthru
      _
    // Predicated region
    $region10: #{tpu_custom_call.1} parent=1 // pred_check
      _
    $region11: #{tpu_custom_call.1} parent=1 // pred_check_branch
      %44 = sbr.rel (0) target = $region13
    $region12: #{tpu_custom_call.1} parent=1 // pred_region
      %45 = dma.done [#allocation3], 128
    $region13: #{tpu_custom_call.1} parent=1 // pred_fallthru
      _
    // Predicated region
    $region14: #{tpu_custom_call.1} parent=1 // pred_check
      _
    $region15: #{tpu_custom_call.1} parent=1 // pred_check_branch
      %47 = sbr.rel (0) target = $region17
    $region16: #{tpu_custom_call.1} parent=1 // pred_region
      %48 = dma.done [#allocation6], 128
    $region17: #{tpu_custom_call.1} parent=1 // pred_fallthru
      _
    %s49 = sadd.s32 0, 0
    %p50 = scmp.lt.s32.totalorder %s49, 0
    %s51 = scalar_select %p50, %s49, 0
    %s52 = sadd.s32 0, 0
    %p53 = scmp.lt.s32.totalorder %s52, 0
    %s54 = scalar_select %p53, %s52, 0
    %p55 = scmp.eq.s32.totalorder 0, 0
    // Predicated region
    $region18: #{tpu_custom_call.1} parent=1 // pred_check
      %p56 = pneg %p55
    $region19: #{tpu_custom_call.1} parent=1 // pred_check_branch
      %58 = sbr.rel (%p56) target = $region21
    $region20: #{tpu_custom_call.1} parent=1 // pred_region
      %59 = vst [vmem:[#allocation7] sm:$0xff] 0.0
      %60 = vst [vmem:[#allocation8] sm:$0xff] 0.0
    $region21: #{tpu_custom_call.1} parent=1 // pred_fallthru
      _
    %v61 = vld [vmem:[#allocation2] sm:$0xff]
    %v62 = vld [vmem:[#allocation5] sm:$0xff]
    %vm63 = vcmp.ge.f32.partialorder %v62, -999.0
    %v64 = vsub.f32 %v61, %v62
    %v65 = vmul.f32 %v64, %v64
    %v66 = vsel %vm63, %v65, 0.0
    %v67 = vsel %vm63, 1.0, 0.0
    %v68 = vld [vmem:[#allocation7] sm:$0xff]
    %v69 = vadd.f32 %v66, 0.0
    %v70 = vadd.f32 %v68, %v69
    %71 = vst [vmem:[#allocation7] sm:$0xff] %v70
    %v72 = vld [vmem:[#allocation8] sm:$0xff]
    %v73 = vadd.f32 %v67, 0.0
    %v74 = vadd.f32 %v72, %v73
    %75 = vst [vmem:[#allocation8] sm:$0xff] %v74
    // Predicated region
    $region22: #{tpu_custom_call.1} parent=1 // pred_check
      _
    $region23: #{tpu_custom_call.1} parent=1 // pred_check_branch
      %77 = sbr.rel (0) target = $region25
    $region24: #{tpu_custom_call.1} parent=1 // pred_region
      %s79 = ssub.s32 128, 128
      %80 = vsyncadd [#allocation4], %s79
      %s82 = sshll.u32 [#allocation7], 4
      %s83 = int_to_ptr.vmem [resolvable:$true] %s82
      %85 = dma.vmem_to_hbm [thread:$0]  %s83, 128, %s2, [#allocation4]
    $region25: #{tpu_custom_call.1} parent=1 // pred_fallthru
      _
    // Predicated region
    $region26: #{tpu_custom_call.1} parent=1 // pred_check
      _
    $region27: #{tpu_custom_call.1} parent=1 // pred_check_branch
      %87 = sbr.rel (0) target = $region29
    $region28: #{tpu_custom_call.1} parent=1 // pred_region
      %s89 = ssub.s32 128, 128
      %90 = vsyncadd [#allocation9], %s89
      %s92 = sshll.u32 [#allocation8], 4
      %s93 = int_to_ptr.vmem [resolvable:$true] %s92
      %95 = dma.vmem_to_hbm [thread:$0]  %s93, 128, %s3, [#allocation9]
    $region29: #{tpu_custom_call.1} parent=1 // pred_fallthru
      _
    // Predicated region
    $region30: #{tpu_custom_call.1} parent=1 // pred_check
      _
    $region31: #{tpu_custom_call.1} parent=1 // pred_check_branch
      %97 = sbr.rel (0) target = $region33
    $region32: #{tpu_custom_call.1} parent=1 // pred_region
      %98 = dma.done [#allocation4], 128
    $region33: #{tpu_custom_call.1} parent=1 // pred_fallthru
      _
    // Predicated region
    $region34: #{tpu_custom_call.1} parent=1 // pred_check
      _
    $region35: #{tpu_custom_call.1} parent=1 // pred_check_branch
      %100 = sbr.rel (0) target = $region37
    $region36: #{tpu_custom_call.1} parent=1 // pred_region
      %101 = dma.done [#allocation9], 128
    $region37: #{tpu_custom_call.1} parent=1 // pred_fallthru
      _
    %102 = vsyncpa [#allocation3], 1
    %103 = vsyncpa [#allocation6], 1
    %104 = vsyncpa [#allocation4], 1
    %105 = vsyncpa [#allocation9], 1

</llo_original>
